<compile_context>
chip_gen: v5e
topology: v5e:2x2
jax: 0.10.0
libtpu: 0.0.40
codegen_flags: <defaults>
</compile_context>

<pallas_src>
import numpy as np
import jax
import jax.numpy as jnp
from jax.experimental import pallas as pl
from jax.experimental.pallas import tpu as pltpu


def _round_up(x, m):
    return ((x + m - 1) // m) * m


# ----------------------------------------------------------------------------
# Host-side (deterministic) parameter setup, mirroring the PyTorch module.
# ----------------------------------------------------------------------------
def _hamming(n):
    # scipy.signal.hamming(n, sym=True) equivalent
    return 0.54 - 0.46 * np.cos(2.0 * np.pi * np.arange(n) / (n - 1))


def _gl_alg(window_size, hop, fft_size):
    """Ideal synthesis window (Griffin & Lim 1984) -- verbatim numpy port."""
    syn_w = _hamming(window_size) / np.sqrt(fft_size)
    syn_w_prod = (syn_w ** 2.0).reshape(window_size, 1)
    redundancy = int(window_size / hop)
    env = np.zeros((window_size, 1))
    for k in range(-redundancy, redundancy + 1):
        win_ind = np.arange(1, window_size + 1)
        env_ind = hop * k + win_ind
        valid = np.where((env_ind > 0) & (env_ind <= window_size))
        env_ind = env_ind[valid] - 1
        win_ind = win_ind[valid] - 1
        env[env_ind] += syn_w_prod[win_ind]
    return syn_w / env[:, 0]


# ----------------------------------------------------------------------------
# Pure numpy reference (mirrors the torch module forward) for validation.
# ----------------------------------------------------------------------------
def _i_dft_ref(mag, ph, window_size):
    fft_size = mag.size
    fft_points = (fft_size - 1) * 2
    hw_1 = int(np.floor((window_size + 1) / 2))
    hw_2 = int(np.floor(window_size / 2))
    tmp = np.zeros(fft_points, dtype=complex)
    td = np.zeros(window_size)
    tmp[0:fft_size] = mag * np.exp(1j * ph)
    tmp[fft_size:] = mag[-2:0:-1] * np.exp(-1j * ph[-2:0:-1])
    buf = np.real(np.fft.ifft(tmp))
    td[:hw_2] = buf[-hw_2:]
    td[hw_2:] = buf[:hw_1]
    return td


def istft_reference(mag, ph, n_fft, hop, win):
    rs = _gl_alg(win, hop, (win - 1) * 2)
    hw_1 = int(np.floor((win + 1) / 2))
    hw_2 = int(np.floor(win / 2))
    nb_frames = mag.shape[0]
    sig = np.zeros(nb_frames * hop + hw_1 + hw_2)
    pin = 0
    for i in range(nb_frames):
        y = _i_dft_ref(mag[i, :], ph[i, :], win)
        sig[pin:pin + win] += y * rs
        pin += hop
    sig = np.delete(sig, range(3 * hop))
    sig = np.delete(sig, range(sig.size - (3 * hop + 1), sig.size))
    return sig


# ----------------------------------------------------------------------------
# Pallas kernel: batched, fused iDFT-as-matmul producing lane-dense frames.
# ----------------------------------------------------------------------------
def _istft_frames_kernel(mag_ref, ph_ref, cb_ref, sbn_ref, out_ref, a_sc, b_sc):
    # Trig (the EUP-saturating work) is computed ONCE per frame block and
    # reused across every W tile (inner grid axis j).
    @pl.when(pl.program_id(1) == 0)
    def _():
        m = mag_ref[...]
        p = ph_ref[...]
        a_sc[...] = m * jnp.cos(p)        # (Tb, Fp): VPU + EUP
        b_sc[...] = m * jnp.sin(p)

    # Two K=Fp MXU passes per (Tb, TN) output tile; zero-padded K rows/cols
    # contribute nothing so results are bit-identical to the unpadded math.
    out_ref[...] = (
        jnp.dot(a_sc[...], cb_ref[...], preferred_element_type=jnp.float32)
        + jnp.dot(b_sc[...], sbn_ref[...], preferred_element_type=jnp.float32))


def istft_pallas(magnitude, phase, n_fft, hop_length, win_length):
    T, F = magnitude.shape
    W = win_length
    hop = hop_length
    N = (F - 1) * 2                          # ifft points per frame
    hw_1 = int(np.floor((W + 1) / 2))
    hw_2 = int(np.floor(W / 2))
    L = T * hop + hw_1 + hw_2                # overlap-add buffer length

    # ---- host-side constants: fused synthesis bases ------------------------
    rs = _gl_alg(W, hop, (W - 1) * 2)                        # (W,)
    k = np.arange(F)[None, :]                                # (1, F)
    m = np.arange(W)[:, None]                                # (W, 1)
    wk = np.where((k == 0) | (k == F - 1), 1.0, 2.0)         # conj-symmetry weights
    theta = 2.0 * np.pi * k * (m - hw_2) / N                 # folds fftshift
    cmat = rs[:, None] * wk / N * np.cos(theta)              # (W, F)
    smat = rs[:, None] * wk / N * np.sin(theta)              # (W, F)

    # ---- padded / tiled dims ------------------------------------------------
    # Contraction dim: lane-dense when F is small, 8-aligned otherwise.
    Fp = _round_up(F, 128) if F <= 256 else _round_up(F, 8)
    W_ola = _round_up(W, hop)                    # multiple of hop (shifted-add OLA)
    TN = 512 if W > 512 else _round_up(W, 128)   # W-axis tile (bounds VMEM on v7x)
    W_pad = _round_up(max(W, W_ola), TN)         # lane-dense, TN-divisible output

    basis_c = np.zeros((Fp, W_pad), dtype=np.float32)
    basis_s = np.zeros((Fp, W_pad), dtype=np.float32)
    basis_c[:F, :W] = cmat.T
    basis_s[:F, :W] = -smat.T

    # Frame-block tiling: >= 2 blocks when T is non-trivial, capped at 128
    # (matches v5e MXU height, keeps per-step VMEM low, more pipeline steps).
    Tb = min(128, _round_up(max(1, -(-T // 2)), 8))
    T_pad = _round_up(T, Tb)
    grid = (T_pad // Tb, W_pad // TN)

    # ---- inputs: stream mag / ph directly (no wrapper-side concat) ----------
    mag = jnp.asarray(magnitude, jnp.float32)
    ph = jnp.asarray(phase, jnp.float32)
    if (T_pad, Fp) != (T, F):
        pad = ((0, T_pad - T), (0, Fp - F))
        mag = jnp.pad(mag, pad)      # zero mag => zero contribution, any phase
        ph = jnp.pad(ph, pad)

    # ---- VMEM budget: actual resident buffers, generation-aware cap --------
    est_bytes = (2 * 2 * Tb * Fp * 4        # mag + ph blocks, double-buffered
                 + 2 * 2 * Fp * TN * 4      # two basis tiles, double-buffered
                 + 2 * Tb * TN * 4          # output tile, double-buffered
                 + 2 * Tb * Fp * 4)         # a/b scratch
    try:
        phys_vmem = int(pltpu.get_tpu_info().vmem_capacity_bytes)
    except Exception:
        phys_vmem = 64 << 20                # conservative (v7x per-TC)
    vmem_cap = (phys_vmem * 5) // 8         # leave headroom for compiler scratch
    vmem_limit = int(min(max(2 * est_bytes, 32 << 20), vmem_cap))

    frames = pl.pallas_call(
        _istft_frames_kernel,
        out_shape=jax.ShapeDtypeStruct((T_pad, W_pad), jnp.float32),
        grid_spec=pltpu.PrefetchScalarGridSpec(
            num_scalar_prefetch=0,
            grid=grid,
            in_specs=[
                pl.BlockSpec((Tb, Fp), lambda i, j: (i, 0)),     # mag
                pl.BlockSpec((Tb, Fp), lambda i, j: (i, 0)),     # ph
                pl.BlockSpec((Fp, TN), lambda i, j: (0, j)),     # cos basis tile
                pl.BlockSpec((Fp, TN), lambda i, j: (0, j)),     # -sin basis tile
            ],
            out_specs=pl.BlockSpec((Tb, TN), lambda i, j: (i, j)),
            scratch_shapes=[pltpu.VMEM((Tb, Fp), jnp.float32),   # a = mag*cos(ph)
                            pltpu.VMEM((Tb, Fp), jnp.float32)],  # b = mag*sin(ph)
        ),
        compiler_params=pltpu.CompilerParams(
            # frame blocks are independent (megacore); W tiles reuse the a/b
            # scratch so that axis must stay "arbitrary" (and innermost).
            dimension_semantics=("parallel", "arbitrary"),
            vmem_limit_bytes=vmem_limit),
    )(mag, ph, jnp.asarray(basis_c), jnp.asarray(basis_s))

    # ---- fused overlap-add: one stack + sum over R shifted chunk streams ----
    R = W_ola // hop
    chunks = frames[:T, :W_ola].reshape(T, R, hop)   # cols >= W are zero by construction
    rows = [
        jnp.pad(chunks[:, r, :].reshape(T * hop), (r * hop, (R - 1 - r) * hop))
        for r in range(R)
    ]
    sig_full = jnp.sum(jnp.stack(rows, axis=0), axis=0)   # length (T+R-1)*hop

    # trim (np.delete of leading 3*hop and trailing 3*hop+1 samples)
    return sig_full[3 * hop: L - (3 * hop + 1)]


if __name__ == "__main__":
    # small, forward-consistent shapes
    n_fft = 64
    win_length = 64
    hop_length = 16
    T = 8                                   # nb_frames
    F = n_fft // 2 + 1                      # 33 frequency bins

    key = jax.random.PRNGKey(0)
    k1, k2 = jax.random.split(key)
    magnitude = jnp.abs(jax.random.normal(k1, (T, F), dtype=jnp.float32))
    phase = jax.random.uniform(k2, (T, F), dtype=jnp.float32,
                               minval=-np.pi, maxval=np.pi)

    out = istft_pallas(magnitude, phase, n_fft, hop_length, win_length)
    out = jax.block_until_ready(out)

    ref = istft_reference(np.asarray(magnitude, dtype=np.float64),
                          np.asarray(phase, dtype=np.float64),
                          n_fft, hop_length, win_length)
    assert out.shape == ref.shape, (out.shape, ref.shape)
    np.testing.assert_allclose(np.asarray(out), ref, rtol=1e-3, atol=2e-3)
    print("KERNEL_OK")
</pallas_src>

<mosaic_0001>
module attributes {stable_mosaic.version = 11 : i64} {
  func.func @_istft_frames_kernel(%arg0: i32, %arg1: i32, %arg2: memref<8x128xf32, #tpu.memory_space<vmem>>, %arg3: memref<8x128xf32, #tpu.memory_space<vmem>>, %arg4: memref<128x128xf32, #tpu.memory_space<vmem>>, %arg5: memref<128x128xf32, #tpu.memory_space<vmem>>, %arg6: memref<8x128xf32, #tpu.memory_space<vmem>>, %arg7: memref<8x128xf32, #tpu.memory_space<vmem>>, %arg8: memref<8x128xf32, #tpu.memory_space<vmem>>) attributes {dimension_semantics = [#tpu.dimension_semantics<parallel>, #tpu.dimension_semantics<arbitrary>], iteration_bounds = array<i64: 1, 1>, scalar_prefetch = 0 : i64, scratch_operands = 2 : i64, tpu.core_type = #tpu.core_type<tc>, window_params = [{transform_indices = @transform_0, window_bounds = array<i64: 8, 128>}, {transform_indices = @transform_1, window_bounds = array<i64: 8, 128>}, {transform_indices = @transform_2, window_bounds = array<i64: 128, 128>}, {transform_indices = @transform_3, window_bounds = array<i64: 128, 128>}, {transform_indices = @transform_4, window_bounds = array<i64: 8, 128>}]} {
    %c0_i32 = arith.constant 0 : i32
    %0 = arith.cmpi eq, %arg1, %c0_i32 : i32
    %1 = arith.extui %0 : i1 to i32
    %c0_i32_0 = arith.constant 0 : i32
    %2 = arith.cmpi ne, %1, %c0_i32_0 : i32
    scf.if %2 {
      %c0_11 = arith.constant 0 : index
      %c0_12 = arith.constant 0 : index
      %11 = vector.load %arg2[%c0_11, %c0_12] : memref<8x128xf32, #tpu.memory_space<vmem>>, vector<8x128xf32>
      %c0_13 = arith.constant 0 : index
      %c0_14 = arith.constant 0 : index
      %12 = vector.load %arg3[%c0_13, %c0_14] : memref<8x128xf32, #tpu.memory_space<vmem>>, vector<8x128xf32>
      %13 = math.cos %12 : vector<8x128xf32>
      %14 = arith.mulf %11, %13 : vector<8x128xf32>
      %c0_15 = arith.constant 0 : index
      %c0_16 = arith.constant 0 : index
      %15 = vector.load %arg7[%c0_15, %c0_16] : memref<8x128xf32, #tpu.memory_space<vmem>>, vector<8x128xf32>
      tpu.vector_store %arg7[%c0_15, %c0_16], %14 {strides = array<i32>} : memref<8x128xf32, #tpu.memory_space<vmem>>, vector<8x128xf32>,
      %16 = math.sin %12 : vector<8x128xf32>
      %17 = arith.mulf %11, %16 : vector<8x128xf32>
      %c0_17 = arith.constant 0 : index
      %c0_18 = arith.constant 0 : index
      %18 = vector.load %arg8[%c0_17, %c0_18] : memref<8x128xf32, #tpu.memory_space<vmem>>, vector<8x128xf32>
      tpu.vector_store %arg8[%c0_17, %c0_18], %17 {strides = array<i32>} : memref<8x128xf32, #tpu.memory_space<vmem>>, vector<8x128xf32>,
    } else {
    }
    %c0 = arith.constant 0 : index
    %c0_1 = arith.constant 0 : index
    %3 = vector.load %arg7[%c0, %c0_1] : memref<8x128xf32, #tpu.memory_space<vmem>>, vector<8x128xf32>
    %c0_2 = arith.constant 0 : index
    %c0_3 = arith.constant 0 : index
    %4 = vector.load %arg4[%c0_2, %c0_3] : memref<128x128xf32, #tpu.memory_space<vmem>>, vector<128x128xf32>
    %cst = arith.constant dense<0.000000e+00> : vector<8x128xf32>
    %5 = tpu.matmul %3, %4, %cst {dimension_numbers = #tpu.dot_dimension_numbers<[1], [0], [0], [1], [0, 0, 1, 1], [], []>} : vector<8x128xf32>, vector<128x128xf32>, vector<8x128xf32> -> vector<8x128xf32>
    %c0_4 = arith.constant 0 : index
    %c0_5 = arith.constant 0 : index
    %6 = vector.load %arg8[%c0_4, %c0_5] : memref<8x128xf32, #tpu.memory_space<vmem>>, vector<8x128xf32>
    %c0_6 = arith.constant 0 : index
    %c0_7 = arith.constant 0 : index
    %7 = vector.load %arg5[%c0_6, %c0_7] : memref<128x128xf32, #tpu.memory_space<vmem>>, vector<128x128xf32>
    %cst_8 = arith.constant dense<0.000000e+00> : vector<8x128xf32>
    %8 = tpu.matmul %6, %7, %cst_8 {dimension_numbers = #tpu.dot_dimension_numbers<[1], [0], [0], [1], [0, 0, 1, 1], [], []>} : vector<8x128xf32>, vector<128x128xf32>, vector<8x128xf32> -> vector<8x128xf32>
    %9 = arith.addf %5, %8 : vector<8x128xf32>
    %c0_9 = arith.constant 0 : index
    %c0_10 = arith.constant 0 : index
    %10 = vector.load %arg6[%c0_9, %c0_10] : memref<8x128xf32, #tpu.memory_space<vmem>>, vector<8x128xf32>
    tpu.vector_store %arg6[%c0_9, %c0_10], %9 {strides = array<i32>} : memref<8x128xf32, #tpu.memory_space<vmem>>, vector<8x128xf32>,
    return
  }
  func.func @transform_0(%arg0: i32, %arg1: i32) -> (i32, i32) {
    %c0_i32 = arith.constant 0 : i32
    %c0_i32_0 = arith.constant 0 : i32
    return %arg0, %c0_i32 : i32, i32
  }
  func.func @transform_1(%arg0: i32, %arg1: i32) -> (i32, i32) {
    %c0_i32 = arith.constant 0 : i32
    %c0_i32_0 = arith.constant 0 : i32
    return %arg0, %c0_i32 : i32, i32
  }
  func.func @transform_2(%arg0: i32, %arg1: i32) -> (i32, i32) {
    %c0_i32 = arith.constant 0 : i32
    %c0_i32_0 = arith.constant 0 : i32
    return %c0_i32, %arg1 : i32, i32
  }
  func.func @transform_3(%arg0: i32, %arg1: i32) -> (i32, i32) {
    %c0_i32 = arith.constant 0 : i32
    %c0_i32_0 = arith.constant 0 : i32
    return %c0_i32, %arg1 : i32, i32
  }
  func.func @transform_4(%arg0: i32, %arg1: i32) -> (i32, i32) {
    %c0_i32 = arith.constant 0 : i32
    return %arg0, %arg1 : i32, i32
  }
}

</mosaic_0001>

<llo_original>
// kernel: tpu_custom_call.1
$region0: #{tpu_custom_call.1}
  #allocation0 [shape = 'u32[]', space=smem, size = 0x4, offset = 0x4, fixed_abs, tag = 'smem constant byte address 0x4 - core index']
  #allocation1 [shape = 'u32[72,128]{1,0:T(1,128)}', space=vmem, size = 0x9000, scoped, tag = 'internal scratch']
  #allocation2 [shape = 'f32[8,128]{1,0:T(8,128)}', space=vmem, size = 0x1000, scoped, tag = 'scratch operand']
  #allocation3 [shape = 'f32[8,128]{1,0:T(8,128)}', space=vmem, size = 0x1000, scoped, tag = 'scratch operand']
  %s0 = inlined_call_operand.hbm [shape: f32[8,128], index: 0, kind: input, shape index: {}]
  %s1 = inlined_call_operand.hbm [shape: f32[8,128], index: 1, kind: input, shape index: {}]
  %s2 = inlined_call_operand.hbm [shape: f32[128,128], index: 2, kind: input, shape index: {}]
  %s3 = inlined_call_operand.hbm [shape: f32[128,128], index: 3, kind: input, shape index: {}]
  %s4 = inlined_call_operand.hbm [shape: f32[8,128], index: 4, kind: output, shape index: {}]
  %s5 = sld [smem:[#allocation0]]
  $region46: #{tpu_custom_call.1} parent=0
    _
  %s7 = ssub.s32 1, %s5
  %s8 = scalar_select 0, %s7, %s5
  $region1: #{tpu_custom_call.1} parent=0
    #allocation4 [shape = 'u8[4096]{0}', space=vmem, size = 0x1000, scoped, tag = 'input window, operand 0, single buffered']
    #allocation5 [shape = 's32[1]{0}', space=sflag, size = 0x4, scoped, tag = 'scoped memory for tpu_custom_call.1']
    #allocation6 [shape = 's32[1]{0}', space=sflag, size = 0x4, scoped, tag = 'scoped memory for tpu_custom_call.1']
    #allocation7 [shape = 'u8[4096]{0}', space=vmem, size = 0x1000, scoped, tag = 'input window, operand 1, single buffered']
    #allocation8 [shape = 's32[1]{0}', space=sflag, size = 0x4, scoped, tag = 'scoped memory for tpu_custom_call.1']
    #allocation9 [shape = 'u8[65536]{0}', space=vmem, size = 0x10000, scoped, tag = 'input window, operand 2, single buffered']
    #allocation10 [shape = 'u8[65536]{0}', space=vmem, size = 0x10000, scoped, tag = 'input window, operand 3, single buffered']
    #allocation11 [shape = 's32[1]{0}', space=sflag, size = 0x4, scoped, tag = 'scoped memory for tpu_custom_call.1']
    #allocation12 [shape = 'u8[4096]{0}', space=vmem, size = 0x1000, scoped, tag = 'output window, operand 0, single buffered']
    %9 = vsyncpa [#allocation5], 0
    %10 = vsyncpa [#allocation8], 0
    %11 = vsyncpa [#allocation11], 0
    %12 = vsyncpa [#allocation6], 0
    // Predicated region
    $region2: #{tpu_custom_call.1} parent=1 // pred_check
      _
    $region3: #{tpu_custom_call.1} parent=1 // pred_check_branch
      %14 = sbr.rel (0) target = $region5
    $region4: #{tpu_custom_call.1} parent=1 // pred_region
      %16 = vsyncadd [#allocation5], 0
      %s18 = sshll.u32 %s0, 4
      %s19 = int_to_ptr.hbm [resolvable:$true] %s18
      %s20 = sshll.u32 [#allocation4], 4
      %s21 = int_to_ptr.vmem [resolvable:$true] %s20
      %23 = dma.hbm_to_vmem [thread:$0]  %s19, 128, %s21, [#allocation5]
    $region5: #{tpu_custom_call.1} parent=1 // pred_fallthru
      _
    // Predicated region
    $region6: #{tpu_custom_call.1} parent=1 // pred_check
      _
    $region7: #{tpu_custom_call.1} parent=1 // pred_check_branch
      %25 = sbr.rel (0) target = $region9
    $region8: #{tpu_custom_call.1} parent=1 // pred_region
      %27 = vsyncadd [#allocation8], 0
      %s29 = sshll.u32 %s1, 4
      %s30 = int_to_ptr.hbm [resolvable:$true] %s29
      %s31 = sshll.u32 [#allocation7], 4
      %s32 = int_to_ptr.vmem [resolvable:$true] %s31
      %34 = dma.hbm_to_vmem [thread:$0]  %s30, 128, %s32, [#allocation8]
    $region9: #{tpu_custom_call.1} parent=1 // pred_fallthru
      _
    // Predicated region
    $region10: #{tpu_custom_call.1} parent=1 // pred_check
      _
    $region11: #{tpu_custom_call.1} parent=1 // pred_check_branch
      %36 = sbr.rel (0) target = $region13
    $region12: #{tpu_custom_call.1} parent=1 // pred_region
      %38 = vsyncadd [#allocation8], 0
      %s39 = sshll.u32 %s2, 4
      %s40 = int_to_ptr.hbm [resolvable:$true] %s39
      %s41 = sshll.u32 [#allocation9], 4
      %s42 = int_to_ptr.vmem [resolvable:$true] %s41
      %47 = dma.hbm_to_vmem [thread:$0]  %s40, 2048, %s42, [#allocation8], 128, 128, 8
    $region13: #{tpu_custom_call.1} parent=1 // pred_fallthru
      _
    // Predicated region
    $region14: #{tpu_custom_call.1} parent=1 // pred_check
      _
    $region15: #{tpu_custom_call.1} parent=1 // pred_check_branch
      %49 = sbr.rel (0) target = $region17
    $region16: #{tpu_custom_call.1} parent=1 // pred_region
      %51 = vsyncadd [#allocation11], 0
      %s52 = sshll.u32 %s3, 4
      %s53 = int_to_ptr.hbm [resolvable:$true] %s52
      %s54 = sshll.u32 [#allocation10], 4
      %s55 = int_to_ptr.vmem [resolvable:$true] %s54
      %60 = dma.hbm_to_vmem [thread:$0]  %s53, 2048, %s55, [#allocation11], 128, 128, 8
    $region17: #{tpu_custom_call.1} parent=1 // pred_fallthru
      _
    // Predicated region
    $region18: #{tpu_custom_call.1} parent=1 // pred_check
      _
    $region19: #{tpu_custom_call.1} parent=1 // pred_check_branch
      %62 = sbr.rel (0) target = $region21
    $region20: #{tpu_custom_call.1} parent=1 // pred_region
      %64 = dma.done [#allocation5], 128
    $region21: #{tpu_custom_call.1} parent=1 // pred_fallthru
      _
    // Predicated region
    $region22: #{tpu_custom_call.1} parent=1 // pred_check
      _
    $region23: #{tpu_custom_call.1} parent=1 // pred_check_branch
      %66 = sbr.rel (0) target = $region25
    $region24: #{tpu_custom_call.1} parent=1 // pred_region
      %68 = dma.done [#allocation8], 128
    $region25: #{tpu_custom_call.1} parent=1 // pred_fallthru
      _
    // Predicated region
    $region26: #{tpu_custom_call.1} parent=1 // pred_check
      _
    $region27: #{tpu_custom_call.1} parent=1 // pred_check_branch
      %70 = sbr.rel (0) target = $region29
    $region28: #{tpu_custom_call.1} parent=1 // pred_region
      %72 = dma.done [#allocation8], 2048
    $region29: #{tpu_custom_call.1} parent=1 // pred_fallthru
      _
    // Predicated region
    $region30: #{tpu_custom_call.1} parent=1 // pred_check
      _
    $region31: #{tpu_custom_call.1} parent=1 // pred_check_branch
      %74 = sbr.rel (0) target = $region33
    $region32: #{tpu_custom_call.1} parent=1 // pred_region
      %76 = dma.done [#allocation11], 2048
    $region33: #{tpu_custom_call.1} parent=1 // pred_fallthru
      _
    %p77 = scmp.eq.s32.totalorder 0, 0
    // Predicated region
    $region34: #{tpu_custom_call.1} parent=1 // pred_check
      %p78 = pneg %p77
    $region35: #{tpu_custom_call.1} parent=1 // pred_check_branch
      %80 = sbr.rel (%p78) target = $region37
    $region36: #{tpu_custom_call.1} parent=1 // pred_region
      %v81 = vld [vmem:[#allocation4] sm:$0xff]
      %v82 = vld [vmem:[#allocation7] sm:$0xff]
      %v83 = vand.u32 2147483647, %v82
      %vm84 = vcmp.le.f32.partialorder %v83, 0.7853982
      %vm85 = vcmp.lt.s32.totalorder %v82, 0
      %v86 = vand.u32 %v82, 2139095040
      %v87 = vshrl.u32 %v86, 23
      %v88 = vsub.s32 %v87, 127
      %v89 = vand.u32 2147483647, %v82
      %v90 = vand.u32 %v89, 8388607
      %v91 = vor.u32 %v90, 8388608
      %v92 = vsub.s32 0, %v91
      %v93 = vadd.s32 %v88, 1
      %vm94 = vcmp.gt.s32.totalorder %v93, 0
      %v95 = vsel %vm94, %v93, 0
      %v96 = vshrl.u32 %v95, 5
      %v97 = vand.u32 %v95, 31
      %v98 = vsub.s32 32, %v97
      %v99 = vshrl.u32 683565275, %v98
      %v100 = vshll.u32 683565275, %v97
      %v101 = vshrl.u32 2475754826, %v98
      %v102 = vor.u32 %v100, %v101
      %v103 = vshll.u32 2475754826, %v97
      %v104 = vshrl.u32 2131351028, %v98
      %v105 = vor.u32 %v103, %v104
      %v106 = vshll.u32 2131351028, %v97
      %v107 = vshrl.u32 2102212464, %v98
      %v108 = vor.u32 %v106, %v107
      %v109 = vshll.u32 2102212464, %v97
      %v110 = vshrl.u32 920167782, %v98
      %v111 = vor.u32 %v109, %v110
      %v112 = vshll.u32 920167782, %v97
      %v113 = vshrl.u32 1326507024, %v98
      %v114 = vor.u32 %v112, %v113
      %vm115 = vcmp.lt.s32.totalorder %v96, 1
      %vm116 = vcmp.lt.s32.totalorder %v96, 2
      %vm117 = vcmp.lt.s32.totalorder %v96, 3
      %vm118 = vcmp.lt.s32.totalorder %v96, 4
      %v119 = vsel %vm115, %v99, %v102
      %v120 = vsel %vm118, %v108, 2102212464
      %v121 = vsel %vm117, %v105, %v120
      %v122 = vsel %vm116, %v119, %v121
      %v123 = vsel %vm115, %v102, %v105
      %v124 = vsel %vm118, %v111, 920167782
      %v125 = vsel %vm117, %v108, %v124
      %v126 = vsel %vm116, %v123, %v125
      %v127 = vsel %vm115, %v105, %v108
      %v128 = vsel %vm118, %v114, 1326507024
      %v129 = vsel %vm117, %v111, %v128
      %v130 = vsel %vm116, %v127, %v129
      %v131 = vshll.u32 %v91, 8
      %v132 = vand.u32 %v131, 65535
      %v133 = vshrl.u32 %v131, 16
      %v134 = vand.u32 %v130, 65535
      %v135 = vshrl.u32 %v130, 16
      %v136 = vmul.u32 %v132, %v134
      %v137 = vmul.u32 %v132, %v135
      %v138 = vmul.u32 %v133, %v134
      %v139 = vmul.u32 %v133, %v135
      %v140 = vshll.u32 %v137, 16
      %v141 = vshrl.u32 %v137, 16
      %v142 = vshll.u32 %v138, 16
      %v143 = vshrl.u32 %v138, 16
      %vm144 = vc.u32 %v136, %v140
      %v145 = vsel %vm144, 1, 0
      %v146 = vadd.s32 %v136, %v140
      %v147 = vadd.s32 %v139, %v145
      %vm148 = vc.u32 %v146, %v142
      %v149 = vsel %vm148, 1, 0
      %v150 = vadd.s32 %v146, %v142
      %v151 = vadd.s32 %v147, %v149
      %v152 = vadd.s32 %v151, %v141
      %v153 = vadd.s32 %v152, %v143
      %v154 = vand.u32 %v131, 65535
      %v155 = vshrl.u32 %v131, 16
      %v156 = vand.u32 %v126, 65535
      %v157 = vshrl.u32 %v126, 16
      %v158 = vmul.u32 %v154, %v156
      %v159 = vmul.u32 %v154, %v157
      %v160 = vmul.u32 %v155, %v156
      %v161 = vmul.u32 %v155, %v157
      %v162 = vshll.u32 %v159, 16
      %v163 = vshrl.u32 %v159, 16
      %v164 = vshll.u32 %v160, 16
      %v165 = vshrl.u32 %v160, 16
      %vm166 = vc.u32 %v158, %v162
      %v167 = vsel %vm166, 1, 0
      %v168 = vadd.s32 %v158, %v162
      %v169 = vadd.s32 %v161, %v167
      %vm170 = vc.u32 %v168, %v164
      %v171 = vsel %vm170, 1, 0
      %v172 = vadd.s32 %v168, %v164
      %v173 = vadd.s32 %v169, %v171
      %v174 = vadd.s32 %v173, %v163
      %v175 = vadd.s32 %v174, %v165
      %v176 = vmul.u32 %v131, %v122
      %v177 = vadd.s32 %v153, %v172
      %vm178 = vc.u32 %v153, %v172
      %v179 = vadd.s32 %v175, 1
      %v180 = vsel %vm178, %v179, %v175
      %v181 = vadd.s32 %v176, %v180
      %v182 = vadd.s32 %v181, 536870912
      %v183 = vshrl.u32 %v182, 30
      %v184 = vshll.u32 %v183, 30
      %v185 = vsub.s32 %v181, %v184
      %vm186 = vcmp.lt.s32.totalorder %v185, 0
      %v187 = vsub.s32 0, %v185
      %v188 = vsel %vm186, %v187, %v185
      %v189 = vclz %v188
      %v190 = vsub.s32 %v189, 2
      %vm191 = vcmp.gt.s32.totalorder 0, %v190
      %v192 = vsel %vm191, 0, %v190
      %v193 = vsub.s32 32, %v192
      %v194 = vshll.u32 %v185, %v192
      %v195 = vshrl.u32 %v177, %v193
      %v196 = vor.u32 %v194, %v195
      %v197 = vsub.s32 4294967266, %v192
      %v198 = vadd.s32 %v197, 127
      %v199 = vshll.u32 %v198, 23
      %v200 = vor.u32 4788187, %v199
      %v201 = vand.u32 2147483647, %v200
      %v203 = vcvt.s32.f32 %v196
      %v204 = vmul.f32 %v203, %v201
      %v205 = vxor.u32 %v204, 2147483648
      %v206 = vsel %vm85, %v205, %v204
      %v207 = vsub.s32 4, %v183
      %v208 = vsel %vm85, %v207, %v183
      %v209 = vsel %vm84, %v82, %v206
      %v210 = vsel %vm84, 0, %v208
      %v211 = vmul.f32 %v209, %v209
      %v212 = vmul.f32 %v211, -0.001358992
      %v213 = vadd.f32 %v212, 0.041655596
      %v214 = vmul.f32 %v211, %v213
      %v215 = vadd.f32 %v214, -0.4999988
      %v216 = vmul.f32 %v211, %v215
      %v217 = vadd.f32 1.0, %v216
      %v218 = vmul.f32 %v209, %v209
      %v219 = vmul.f32 %v218, -0.00019511016
      %v220 = vadd.f32 %v219, 0.008332121
      %v221 = vmul.f32 %v218, %v220
      %v222 = vadd.f32 %v221, -0.16666654
      %v223 = vmul.f32 %v218, %v222
      %v224 = vadd.f32 %v223, 1.0
      %v225 = vmul.f32 %v224, %v209
      %vm226 = vweird.f32 %v82
      %v227 = vand.u32 %v210, 3
      %vm228 = vcmp.lt.s32.totalorder %v227, 2
      %vm229 = vcmp.eq.s32.totalorder %v227, 0
      %v230 = vxor.u32 %v225, 2147483648
      %v231 = vsel %vm229, %v217, %v230
      %vm232 = vcmp.eq.s32.totalorder %v227, 2
      %v233 = vxor.u32 %v217, 2147483648
      %v234 = vsel %vm232, %v233, %v225
      %v235 = vsel %vm228, %v231, %v234
      %v236 = vsel %vm226, nan, %v235
      %v237 = vmul.f32 %v81, %v236
      %238 = vst [vmem:[#allocation2] sm:$0xff] %v237
      %v239 = vand.u32 2147483647, %v82
      %vm240 = vcmp.le.f32.partialorder %v239, 0.7853982
      %vm241 = vcmp.lt.s32.totalorder %v82, 0
      %v242 = vand.u32 %v82, 2139095040
      %v243 = vshrl.u32 %v242, 23
      %v244 = vsub.s32 %v243, 127
      %v245 = vand.u32 2147483647, %v82
      %v246 = vand.u32 %v245, 8388607
      %v247 = vor.u32 %v246, 8388608
      %v248 = vsub.s32 0, %v247
      %v249 = vadd.s32 %v244, 1
      %vm250 = vcmp.gt.s32.totalorder %v249, 0
      %v251 = vsel %vm250, %v249, 0
      %v252 = vshrl.u32 %v251, 5
      %v253 = vand.u32 %v251, 31
      %v254 = vsub.s32 32, %v253
      %v255 = vshrl.u32 683565275, %v254
      %v256 = vshll.u32 683565275, %v253
      %v257 = vshrl.u32 2475754826, %v254
      %v258 = vor.u32 %v256, %v257
      %v259 = vshll.u32 2475754826, %v253
      %v260 = vshrl.u32 2131351028, %v254
      %v261 = vor.u32 %v259, %v260
      %v262 = vshll.u32 2131351028, %v253
      %v263 = vshrl.u32 2102212464, %v254
      %v264 = vor.u32 %v262, %v263
      %v265 = vshll.u32 2102212464, %v253
      %v266 = vshrl.u32 920167782, %v254
      %v267 = vor.u32 %v265, %v266
      %v268 = vshll.u32 920167782, %v253
      %v269 = vshrl.u32 1326507024, %v254
      %v270 = vor.u32 %v268, %v269
      %vm271 = vcmp.lt.s32.totalorder %v252, 1
      %vm272 = vcmp.lt.s32.totalorder %v252, 2
      %vm273 = vcmp.lt.s32.totalorder %v252, 3
      %vm274 = vcmp.lt.s32.totalorder %v252, 4
      %v275 = vsel %vm271, %v255, %v258
      %v276 = vsel %vm274, %v264, 2102212464
      %v277 = vsel %vm273, %v261, %v276
      %v278 = vsel %vm272, %v275, %v277
      %v279 = vsel %vm271, %v258, %v261
      %v280 = vsel %vm274, %v267, 920167782
      %v281 = vsel %vm273, %v264, %v280
      %v282 = vsel %vm272, %v279, %v281
      %v283 = vsel %vm271, %v261, %v264
      %v284 = vsel %vm274, %v270, 1326507024
      %v285 = vsel %vm273, %v267, %v284
      %v286 = vsel %vm272, %v283, %v285
      %v287 = vshll.u32 %v247, 8
      %v288 = vand.u32 %v287, 65535
      %v289 = vshrl.u32 %v287, 16
      %v290 = vand.u32 %v286, 65535
      %v291 = vshrl.u32 %v286, 16
      %v292 = vmul.u32 %v288, %v290
      %v293 = vmul.u32 %v288, %v291
      %v294 = vmul.u32 %v289, %v290
      %v295 = vmul.u32 %v289, %v291
      %v296 = vshll.u32 %v293, 16
      %v297 = vshrl.u32 %v293, 16
      %v298 = vshll.u32 %v294, 16
      %v299 = vshrl.u32 %v294, 16
      %vm300 = vc.u32 %v292, %v296
      %v301 = vsel %vm300, 1, 0
      %v302 = vadd.s32 %v292, %v296
      %v303 = vadd.s32 %v295, %v301
      %vm304 = vc.u32 %v302, %v298
      %v305 = vsel %vm304, 1, 0
      %v306 = vadd.s32 %v302, %v298
      %v307 = vadd.s32 %v303, %v305
      %v308 = vadd.s32 %v307, %v297
      %v309 = vadd.s32 %v308, %v299
      %v310 = vand.u32 %v287, 65535
      %v311 = vshrl.u32 %v287, 16
      %v312 = vand.u32 %v282, 65535
      %v313 = vshrl.u32 %v282, 16
      %v314 = vmul.u32 %v310, %v312
      %v315 = vmul.u32 %v310, %v313
      %v316 = vmul.u32 %v311, %v312
      %v317 = vmul.u32 %v311, %v313
      %v318 = vshll.u32 %v315, 16
      %v319 = vshrl.u32 %v315, 16
      %v320 = vshll.u32 %v316, 16
      %v321 = vshrl.u32 %v316, 16
      %vm322 = vc.u32 %v314, %v318
      %v323 = vsel %vm322, 1, 0
      %v324 = vadd.s32 %v314, %v318
      %v325 = vadd.s32 %v317, %v323
      %vm326 = vc.u32 %v324, %v320
      %v327 = vsel %vm326, 1, 0
      %v328 = vadd.s32 %v324, %v320
      %v329 = vadd.s32 %v325, %v327
      %v330 = vadd.s32 %v329, %v319
      %v331 = vadd.s32 %v330, %v321
      %v332 = vmul.u32 %v287, %v278
      %v333 = vadd.s32 %v309, %v328
      %vm334 = vc.u32 %v309, %v328
      %v335 = vadd.s32 %v331, 1
      %v336 = vsel %vm334, %v335, %v331
      %v337 = vadd.s32 %v332, %v336
      %v338 = vadd.s32 %v337, 536870912
      %v339 = vshrl.u32 %v338, 30
      %v340 = vshll.u32 %v339, 30
      %v341 = vsub.s32 %v337, %v340
      %vm342 = vcmp.lt.s32.totalorder %v341, 0
      %v343 = vsub.s32 0, %v341
      %v344 = vsel %vm342, %v343, %v341
      %v345 = vclz %v344
      %v346 = vsub.s32 %v345, 2
      %vm347 = vcmp.gt.s32.totalorder 0, %v346
      %v348 = vsel %vm347, 0, %v346
      %v349 = vsub.s32 32, %v348
      %v350 = vshll.u32 %v341, %v348
      %v351 = vshrl.u32 %v333, %v349
      %v352 = vor.u32 %v350, %v351
      %v353 = vsub.s32 4294967266, %v348
      %v354 = vadd.s32 %v353, 127
      %v355 = vshll.u32 %v354, 23
      %v356 = vor.u32 4788187, %v355
      %v357 = vand.u32 2147483647, %v356
      %v359 = vcvt.s32.f32 %v352
      %v360 = vmul.f32 %v359, %v357
      %v361 = vxor.u32 %v360, 2147483648
      %v362 = vsel %vm241, %v361, %v360
      %v363 = vsub.s32 4, %v339
      %v364 = vsel %vm241, %v363, %v339
      %v365 = vsel %vm240, %v82, %v362
      %v366 = vsel %vm240, 0, %v364
      %v367 = vmul.f32 %v365, %v365
      %v368 = vmul.f32 %v367, -0.001358992
      %v369 = vadd.f32 %v368, 0.041655596
      %v370 = vmul.f32 %v367, %v369
      %v371 = vadd.f32 %v370, -0.4999988
      %v372 = vmul.f32 %v367, %v371
      %v373 = vadd.f32 1.0, %v372
      %v374 = vmul.f32 %v365, %v365
      %v375 = vmul.f32 %v374, -0.00019511016
      %v376 = vadd.f32 %v375, 0.008332121
      %v377 = vmul.f32 %v374, %v376
      %v378 = vadd.f32 %v377, -0.16666654
      %v379 = vmul.f32 %v374, %v378
      %v380 = vadd.f32 %v379, 1.0
      %v381 = vmul.f32 %v380, %v365
      %vm382 = vweird.f32 %v82
      %v383 = vadd.s32 %v366, 3
      %v384 = vand.u32 %v383, 3
      %vm385 = vcmp.lt.s32.totalorder %v384, 2
      %vm386 = vcmp.eq.s32.totalorder %v384, 0
      %v387 = vxor.u32 %v381, 2147483648
      %v388 = vsel %vm386, %v373, %v387
      %vm389 = vcmp.eq.s32.totalorder %v384, 2
      %v390 = vxor.u32 %v373, 2147483648
      %v391 = vsel %vm389, %v390, %v381
      %v392 = vsel %vm385, %v388, %v391
      %v393 = vsel %vm382, nan, %v392
      %v394 = vmul.f32 %v81, %v393
      %395 = vst [vmem:[#allocation3] sm:$0xff] %v394
    $region37: #{tpu_custom_call.1} parent=1 // pred_fallthru
      _
    %v396 = vld [vmem:[#allocation2] sm:$0xff]
    %v397 = vld [vmem:[#allocation9] sm:$0xff]
    %v398 = vld [vmem:[#allocation9 + $0x8] sm:$0xff]
    %v399 = vld [vmem:[#allocation9 + $0x10] sm:$0xff]
    %v400 = vld [vmem:[#allocation9 + $0x18] sm:$0xff]
    %v401 = vld [vmem:[#allocation9 + $0x20] sm:$0xff]
    %v402 = vld [vmem:[#allocation9 + $0x28] sm:$0xff]
    %v403 = vld [vmem:[#allocation9 + $0x30] sm:$0xff]
    %v404 = vld [vmem:[#allocation9 + $0x38] sm:$0xff]
    %v405 = vld [vmem:[#allocation9 + $0x40] sm:$0xff]
    %v406 = vld [vmem:[#allocation9 + $0x48] sm:$0xff]
    %v407 = vld [vmem:[#allocation9 + $0x50] sm:$0xff]
    %v408 = vld [vmem:[#allocation9 + $0x58] sm:$0xff]
    %v409 = vld [vmem:[#allocation9 + $0x60] sm:$0xff]
    %v410 = vld [vmem:[#allocation9 + $0x68] sm:$0xff]
    %v411 = vld [vmem:[#allocation9 + $0x70] sm:$0xff]
    %v412 = vld [vmem:[#allocation9 + $0x78] sm:$0xff]
    %v413 = vld [vmem:[#allocation3] sm:$0xff]
    %v414 = vld [vmem:[#allocation10] sm:$0xff]
    %v415 = vld [vmem:[#allocation10 + $0x8] sm:$0xff]
    %v416 = vld [vmem:[#allocation10 + $0x10] sm:$0xff]
    %v417 = vld [vmem:[#allocation10 + $0x18] sm:$0xff]
    %v418 = vld [vmem:[#allocation10 + $0x20] sm:$0xff]
    %v419 = vld [vmem:[#allocation10 + $0x28] sm:$0xff]
    %v420 = vld [vmem:[#allocation10 + $0x30] sm:$0xff]
    %v421 = vld [vmem:[#allocation10 + $0x38] sm:$0xff]
    %v422 = vld [vmem:[#allocation10 + $0x40] sm:$0xff]
    %v423 = vld [vmem:[#allocation10 + $0x48] sm:$0xff]
    %v424 = vld [vmem:[#allocation10 + $0x50] sm:$0xff]
    %v425 = vld [vmem:[#allocation10 + $0x58] sm:$0xff]
    %v426 = vld [vmem:[#allocation10 + $0x60] sm:$0xff]
    %v427 = vld [vmem:[#allocation10 + $0x68] sm:$0xff]
    %v428 = vld [vmem:[#allocation10 + $0x70] sm:$0xff]
    %v429 = vld [vmem:[#allocation10 + $0x78] sm:$0xff]
    %430 = vmatpush.msra.mxu0 %v429
    %431 = vmatpush.msra.mxu0 %v428
    %432 = vmatpush.msra.mxu0 %v427
    %433 = vmatpush.msra.mxu0 %v426
    %434 = vmatpush.msra.mxu0 %v425
    %435 = vmatpush.msra.mxu0 %v424
    %436 = vmatpush.msra.mxu0 %v423
    %437 = vmatpush.msra.mxu0 %v422
    %438 = vmatpush.msra.mxu0 %v421
    %439 = vmatpush.msra.mxu0 %v420
    %440 = vmatpush.msra.mxu0 %v419
    %441 = vmatpush.msra.mxu0 %v418
    %442 = vmatpush.msra.mxu0 %v417
    %443 = vmatpush.msra.mxu0 %v416
    %444 = vmatpush.msra.mxu0 %v415
    %445 = vmatpush.msra.mxu0 %v414
    %446 = vmatmul.f32.gmra.mxu0 %v413
    %v447 = vpop.f32.mrf.mxu0
    %v448 = vadd.f32 0.0, %v447
    %449 = vdwg.mxu0
    %450 = vmatpush.msra.mxu0 %v412
    %451 = vmatpush.msra.mxu0 %v411
    %452 = vmatpush.msra.mxu0 %v410
    %453 = vmatpush.msra.mxu0 %v409
    %454 = vmatpush.msra.mxu0 %v408
    %455 = vmatpush.msra.mxu0 %v407
    %456 = vmatpush.msra.mxu0 %v406
    %457 = vmatpush.msra.mxu0 %v405
    %458 = vmatpush.msra.mxu0 %v404
    %459 = vmatpush.msra.mxu0 %v403
    %460 = vmatpush.msra.mxu0 %v402
    %461 = vmatpush.msra.mxu0 %v401
    %462 = vmatpush.msra.mxu0 %v400
    %463 = vmatpush.msra.mxu0 %v399
    %464 = vmatpush.msra.mxu0 %v398
    %465 = vmatpush.msra.mxu0 %v397
    %466 = vmatmul.f32.gmra.mxu0 %v396
    %v467 = vpop.f32.mrf.mxu0
    %v468 = vadd.f32 %v448, %v467
    %469 = vdwg.mxu0
    %470 = vst [vmem:[#allocation12] sm:$0xff] %v468
    // Predicated region
    $region38: #{tpu_custom_call.1} parent=1 // pred_check
      _
    $region39: #{tpu_custom_call.1} parent=1 // pred_check_branch
      %472 = sbr.rel (0) target = $region41
    $region40: #{tpu_custom_call.1} parent=1 // pred_region
      %474 = vsyncadd [#allocation6], 0
      %s476 = sshll.u32 [#allocation12], 4
      %s477 = int_to_ptr.vmem [resolvable:$true] %s476
      %s478 = sshll.u32 %s4, 4
      %s479 = int_to_ptr.hbm [resolvable:$true] %s478
      %481 = dma.vmem_to_hbm [thread:$0]  %s477, 128, %s479, [#allocation6]
    $region41: #{tpu_custom_call.1} parent=1 // pred_fallthru
      _
    // Predicated region
    $region42: #{tpu_custom_call.1} parent=1 // pred_check
      _
    $region43: #{tpu_custom_call.1} parent=1 // pred_check_branch
      %483 = sbr.rel (0) target = $region45
    $region44: #{tpu_custom_call.1} parent=1 // pred_region
      %485 = dma.done [#allocation6], 128
    $region45: #{tpu_custom_call.1} parent=1 // pred_fallthru
      _
    %486 = vsyncpa [#allocation5], 1
    %487 = vsyncpa [#allocation8], 1
    %488 = vsyncpa [#allocation11], 1
    %489 = vsyncpa [#allocation6], 1

</llo_original>
